<compile_context>
chip_gen: v7x
topology: tpu7x:2x2x1
jax: 0.10.0
libtpu: 0.0.40
codegen_flags: <defaults>
</compile_context>

<pallas_src>
import functools
import math

import jax
import jax.numpy as jnp
from jax import lax
from jax.experimental import pallas as pl
from jax.experimental.pallas import tpu as pltpu


# ----------------------------- small helpers --------------------------------


def _add_layernorm_f32(x, y, g, b, eps=1e-5):
    """LayerNorm(x + y) over the last (d_model) axis, all math in f32."""
    z = x + y
    mean = jnp.mean(z, axis=-1, keepdims=True)
    c = z - mean
    var = jnp.mean(c * c, axis=-1, keepdims=True)
    return c * lax.rsqrt(var + eps) * g + b


@functools.lru_cache(maxsize=None)
def _vmem_limit():
    """Scoped-VMEM limit: 75% of physical VMEM (v7x-safe), 96 MiB fallback-free."""
    cap = 128 * 1024 * 1024
    try:
        cap = pltpu.get_tpu_info().vmem_capacity_bytes
    except Exception:
        pass
    return int(cap * 3 // 4)


@functools.lru_cache(maxsize=None)
def _single_buffered_ok():
    """Probe once whether pipeline_mode=pl.Buffered(1) is supported here."""
    def _copy(x_ref, o_ref):
        o_ref[...] = x_ref[...]
    try:
        fn = pl.pallas_call(
            _copy,
            out_shape=jax.ShapeDtypeStruct((8, 128), jnp.float32),
            grid=(1,),
            in_specs=[pl.BlockSpec((8, 128), lambda i: (0, 0),
                                   pipeline_mode=pl.Buffered(buffer_count=1))],
            out_specs=pl.BlockSpec((8, 128), lambda i: (0, 0)),
        )
        jax.block_until_ready(fn(jnp.zeros((8, 128), jnp.float32)))
        return True
    except Exception:
        return False


def _const_spec(shape):
    """Grid-constant (VMEM-resident) parameter; single-buffered when supported."""
    n = len(shape)
    index_map = lambda *_: (0,) * n
    if _single_buffered_ok():
        return pl.BlockSpec(shape, index_map, pipeline_mode=pl.Buffered(buffer_count=1))
    return pl.BlockSpec(shape, index_map)


def _row_tile(s, max_tile):
    """Sublane-axis tile: full length if small, else a multiple of 8 + padding."""
    if s <= max_tile:
        return s, s
    t = max(8, (max_tile // 8) * 8)
    return t, ((s + t - 1) // t) * t


def _lane_tile(s, max_tile):
    """Lane-axis tile: full length if small, else a multiple of 128 + padding."""
    if s <= max_tile:
        return s, s
    t = max(128, (max_tile // 128) * 128)
    return t, ((s + t - 1) // t) * t


def _pad_axis(a, axis, target):
    cur = a.shape[axis]
    if cur == target:
        return a
    pad = [(0, 0)] * a.ndim
    pad[axis] = (0, target - cur)
    return jnp.pad(a, pad)


def _make_bias(mask, sq_pad, sk_pad):
    """(B,Sq,Sk) 0/1 mask -> additive bias (B,sq_pad,sk_pad) bf16; pads masked."""
    bias = jnp.where(mask == 0, jnp.float32(-1e9), jnp.float32(0.0))
    _, sq, sk = bias.shape
    if (sq, sk) != (sq_pad, sk_pad):
        bias = jnp.pad(bias, ((0, 0), (0, sq_pad - sq), (0, sk_pad - sk)),
                       constant_values=-1e9)
    return bias.astype(jnp.bfloat16)


# ----------------------------- kernels --------------------------------------


def _kv_proj_kernel(xkv_ref, wkv_ref, bkv_ref, k_ref, v_ref, *, num_heads):
    """K|V projection for one (batch, seq-tile); head-major bf16 outputs."""
    x_bf = xkv_ref[...].astype(jnp.bfloat16)          # (ts, D)
    d_model = x_bf.shape[-1]
    dh = d_model // num_heads
    kv = jnp.dot(x_bf, wkv_ref[...],
                 preferred_element_type=jnp.float32) + bkv_ref[...]   # (ts, 2D)
    for h in range(num_heads):
        k_ref[h, :, :] = kv[:, h * dh:(h + 1) * dh].astype(k_ref.dtype)
        v_ref[h, :, :] = kv[:, d_model + h * dh:d_model + (h + 1) * dh].astype(v_ref.dtype)


def _mha_ln_kernel(xq_ref, k_ref, v_ref, bias_ref,
                   wq_ref, bq_ref, wo_ref, bo_ref, g_ref, b_ref,
                   o_ref,
                   q_s, m_s, l_s, acc_s, *, num_heads):
    """Flash MHA + out-proj + residual-add + LayerNorm for one (b, q-tile) cell.

    Grid = (B, nq, nk); kv-tile axis is the (sequential) reduction axis.
    xq_ref:  (tq, D)      query-side activations (also the residual branch)
    k_ref:   (H, tk, dh)  pre-projected keys   (bf16, head-major)
    v_ref:   (H, tk, dh)  pre-projected values (bf16, head-major)
    bias_ref:(tq, tk)     additive mask bias (0 keep / -1e9 masked), bf16
    """
    d_model = xq_ref.shape[-1]
    dh = d_model // num_heads
    kk = pl.program_id(2)

    @pl.when(kk == 0)
    def _():
        # Q projected once per q-tile (1/sqrt(dh) already folded into wq/bq),
        # laid out head-major into scratch; online-softmax state reset.
        xq_bf = xq_ref[...].astype(jnp.bfloat16)
        q = jnp.dot(xq_bf, wq_ref[...],
                    preferred_element_type=jnp.float32) + bq_ref[...]
        for h in range(num_heads):
            q_s[h, :, :] = q[:, h * dh:(h + 1) * dh].astype(q_s.dtype)
        m_s[...] = jnp.full_like(m_s, -jnp.inf)
        l_s[...] = jnp.zeros_like(l_s)
        acc_s[...] = jnp.zeros_like(acc_s)

    # Head-batched score matmul: (H, tq, dh) x (H, tk, dh) -> (H, tq, tk)
    s = lax.dot_general(q_s[...], k_ref[...],
                        (((2,), (2,)), ((0,), (0,))),
                        preferred_element_type=jnp.float32)
    s = s + bias_ref[...].astype(jnp.float32)[None, :, :]

    m_prev = m_s[...]
    m_new = jnp.maximum(m_prev, jnp.max(s, axis=-1, keepdims=True))
    alpha = jnp.exp(m_prev - m_new)
    p = jnp.exp(s - m_new)
    l_s[...] = alpha * l_s[...] + jnp.sum(p, axis=-1, keepdims=True)
    acc_s[...] = alpha * acc_s[...] + lax.dot_general(
        p.astype(jnp.bfloat16), v_ref[...],
        (((2,), (1,)), ((0,), (0,))),
        preferred_element_type=jnp.float32)            # (H, tq, dh)
    m_s[...] = m_new

    @pl.when(kk == pl.num_programs(2) - 1)
    def _():
        ctx = acc_s[...] * pl.reciprocal(l_s[...], approx=True)   # (H, tq, dh)
        wo = wo_ref[...]
        acc = None
        for h in range(num_heads):          # once per q-tile (not per kv step)
            part = jnp.dot(ctx[h].astype(jnp.bfloat16),
                           wo[h * dh:(h + 1) * dh, :],
                           preferred_element_type=jnp.float32)
            acc = part if acc is None else acc + part
        attn = acc + bo_ref[...]
        xq = xq_ref[...].astype(jnp.float32)
        o_ref[...] = _add_layernorm_f32(xq, attn, g_ref[...],
                                        b_ref[...]).astype(o_ref.dtype)


def _ffn_ln_kernel(x_ref, w1_ref, b1_ref, w2_ref, b2_ref, g_ref, b_ref,
                   o_ref, acc_s):
    """FFN (F streamed over the reduction axis) + residual-add + LayerNorm."""
    f = pl.program_id(2)

    @pl.when(f == 0)
    def _():
        acc_s[...] = jnp.zeros_like(acc_s)

    x_bf = x_ref[...].astype(jnp.bfloat16)
    h = jnp.dot(x_bf, w1_ref[...], preferred_element_type=jnp.float32) + b1_ref[...]
    h = jnp.maximum(h, 0.0)
    acc_s[...] += jnp.dot(h.astype(jnp.bfloat16), w2_ref[...],
                          preferred_element_type=jnp.float32)

    @pl.when(f == pl.num_programs(2) - 1)
    def _():
        y = acc_s[...] + b2_ref[...]
        x = x_ref[...].astype(jnp.float32)
        o_ref[...] = _add_layernorm_f32(x, y, g_ref[...],
                                        b_ref[...]).astype(o_ref.dtype)


# ----------------------------- wrappers --------------------------------------


def _kv_project(x_kv_bf, wkv, bkv, num_heads, *, s_tile, s_pad):
    """Project K and V once per position into head-major (B, H, S, dh) bf16."""
    B, _, D = x_kv_bf.shape
    dh = D // num_heads
    x_p = _pad_axis(x_kv_bf, 1, s_pad)
    n = s_pad // s_tile

    cost = pl.CostEstimate(
        flops=4 * B * s_pad * D * D,
        transcendentals=0,
        bytes_accessed=B * s_pad * D * 2 + 4 * D * D * 2 + 2 * B * s_pad * D * 2)

    kernel = functools.partial(_kv_proj_kernel, num_heads=num_heads)
    return pl.pallas_call(
        kernel,
        out_shape=(jax.ShapeDtypeStruct((B, num_heads, s_pad, dh), jnp.bfloat16),
                   jax.ShapeDtypeStruct((B, num_heads, s_pad, dh), jnp.bfloat16)),
        grid=(B, n),
        in_specs=[
            pl.BlockSpec((None, s_tile, D), lambda b, j: (b, j, 0)),
            _const_spec((D, 2 * D)),
            _const_spec((1, 2 * D)),
        ],
        out_specs=(
            pl.BlockSpec((None, num_heads, s_tile, dh), lambda b, j: (b, 0, j, 0)),
            pl.BlockSpec((None, num_heads, s_tile, dh), lambda b, j: (b, 0, j, 0)),
        ),
        compiler_params=pltpu.CompilerParams(
            dimension_semantics=("parallel", "parallel"),
            vmem_limit_bytes=_vmem_limit()),
        cost_estimate=cost,
    )(x_p, wkv, bkv)


def mha_add_ln(x_q, x_kv, mask, p, gamma, beta, num_heads, *,
               q_tile=256, kv_tile=512):
    """LayerNorm(x_q + MHA(x_q, x_kv, x_kv, mask)); flash-style, bf16 output."""
    B, Sq, D = x_q.shape
    Skv = x_kv.shape[1]
    assert D % num_heads == 0
    dh = D // num_heads

    tq, sq_pad = _row_tile(Sq, q_tile)
    tk, sk_pad = _lane_tile(Skv, kv_tile)
    nq, nk = sq_pad // tq, sk_pad // tk

    # Fold 1/sqrt(dh) into the Q projection (trace-time, free).
    scale = 1.0 / math.sqrt(dh)
    wq = (p["wq"] * scale).astype(jnp.bfloat16)
    bq = p["bq"] * scale
    wkv = jnp.concatenate([p["wk"], p["wv"]], axis=1).astype(jnp.bfloat16)
    bkv = jnp.concatenate([p["bk"], p["bv"]], axis=1)
    wo = p["wo"].astype(jnp.bfloat16)

    # K/V projected ONCE per position (not once per query tile).
    k_hm, v_hm = _kv_project(x_kv.astype(jnp.bfloat16), wkv, bkv, num_heads,
                             s_tile=tk, s_pad=sk_pad)

    # Additive attention bias (0 keep / -1e9 masked), bf16 to halve mask DMA.
    # TODO(synk): causal / all-ones masks could be generated in-kernel from
    # broadcasted_iota to skip the (B, Sq, Skv) bias DMA entirely.
    bias = _make_bias(mask, sq_pad, sk_pad)
    x_q_p = _pad_axis(x_q, 1, sq_pad)

    cost = pl.CostEstimate(
        flops=4 * B * Sq * D * D + 4 * B * Sq * Skv * D,
        transcendentals=B * num_heads * Sq * Skv,
        bytes_accessed=(B * sq_pad * D * x_q.dtype.itemsize
                        + 2 * B * sk_pad * D * 2 + B * sq_pad * sk_pad * 2
                        + 4 * D * D * 2 + B * sq_pad * D * 2))

    kernel = functools.partial(_mha_ln_kernel, num_heads=num_heads)
    out = pl.pallas_call(
        kernel,
        out_shape=jax.ShapeDtypeStruct((B, sq_pad, D), jnp.bfloat16),
        grid=(B, nq, nk),
        in_specs=[
            pl.BlockSpec((None, tq, D), lambda b, i, k: (b, i, 0)),             # x_q
            pl.BlockSpec((None, num_heads, tk, dh), lambda b, i, k: (b, 0, k, 0)),  # K
            pl.BlockSpec((None, num_heads, tk, dh), lambda b, i, k: (b, 0, k, 0)),  # V
            pl.BlockSpec((None, tq, tk), lambda b, i, k: (b, i, k)),            # bias
            _const_spec((D, D)),      # wq (pre-scaled)
            _const_spec((1, D)),      # bq
            _const_spec((D, D)),      # wo
            _const_spec((1, D)),      # bo
            _const_spec((1, D)),      # ln gamma
            _const_spec((1, D)),      # ln beta
        ],
        out_specs=pl.BlockSpec((None, tq, D), lambda b, i, k: (b, i, 0)),
        scratch_shapes=[
            pltpu.VMEM((num_heads, tq, dh), jnp.bfloat16),   # q (head-major)
            pltpu.VMEM((num_heads, tq, 1), jnp.float32),     # m
            pltpu.VMEM((num_heads, tq, 1), jnp.float32),     # l
            pltpu.VMEM((num_heads, tq, dh), jnp.float32),    # acc
        ],
        compiler_params=pltpu.CompilerParams(
            dimension_semantics=("parallel", "parallel", "arbitrary"),
            vmem_limit_bytes=_vmem_limit()),
        cost_estimate=cost,
    )(x_q_p, k_hm, v_hm, bias, wq, bq, wo, p["bo"], gamma, beta)
    return out[:, :Sq, :]


def ffn_add_ln(x, p, gamma, beta, *, q_tile=256, f_tile=1024):
    """LayerNorm(x + FFN(x)) with the hidden dim streamed over a reduction axis."""
    B, S, D = x.shape
    F = p["w1"].shape[1]
    tq, s_pad = _row_tile(S, q_tile)
    fc, f_pad = _lane_tile(F, f_tile)
    nq, nf = s_pad // tq, f_pad // fc

    x_p = _pad_axis(x, 1, s_pad)
    w1 = _pad_axis(p["w1"], 1, f_pad).astype(jnp.bfloat16)
    b1 = _pad_axis(p["b1"], 1, f_pad)
    w2 = _pad_axis(p["w2"], 0, f_pad).astype(jnp.bfloat16)

    cost = pl.CostEstimate(
        flops=4 * B * S * D * F,
        transcendentals=0,
        bytes_accessed=2 * B * s_pad * D * 2 + 4 * D * f_pad * 2)

    out = pl.pallas_call(
        _ffn_ln_kernel,
        out_shape=jax.ShapeDtypeStruct((B, s_pad, D), jnp.bfloat16),
        grid=(B, nq, nf),
        in_specs=[
            pl.BlockSpec((None, tq, D), lambda b, i, f: (b, i, 0)),
            pl.BlockSpec((D, fc), lambda b, i, f: (0, f)),
            pl.BlockSpec((1, fc), lambda b, i, f: (0, f)),
            pl.BlockSpec((fc, D), lambda b, i, f: (f, 0)),
            _const_spec((1, D)),     # b2
            _const_spec((1, D)),     # ln gamma
            _const_spec((1, D)),     # ln beta
        ],
        out_specs=pl.BlockSpec((None, tq, D), lambda b, i, f: (b, i, 0)),
        scratch_shapes=[pltpu.VMEM((tq, D), jnp.float32)],
        compiler_params=pltpu.CompilerParams(
            dimension_semantics=("parallel", "parallel", "arbitrary"),
            vmem_limit_bytes=_vmem_limit()),
        cost_estimate=cost,
    )(x_p, w1, b1, w2, p["b2"], gamma, beta)
    return out[:, :S, :]


def decoder_layer(x, enc_output, src_mask, tgt_mask, params, num_heads, *,
                  q_tile=256, kv_tile=512, f_tile=1024):
    # TODO(synk): dropout is identity (eval mode); no stochastic masking applied.
    x = mha_add_ln(x, x, tgt_mask, params["self_attn"],
                   params["norm1_g"], params["norm1_b"], num_heads,
                   q_tile=q_tile, kv_tile=kv_tile)
    x = mha_add_ln(x, enc_output, src_mask, params["cross_attn"],
                   params["norm2_g"], params["norm2_b"], num_heads,
                   q_tile=q_tile, kv_tile=kv_tile)
    x = ffn_add_ln(x, params["ffn"], params["norm3_g"], params["norm3_b"],
                   q_tile=q_tile, f_tile=f_tile)
    return x


# ----------------------------- reference (pure JAX, f32) ---------------------


def _mha_ref(x_q, x_kv, mask, p, num_heads):
    q = x_q @ p["wq"] + p["bq"]
    k = x_kv @ p["wk"] + p["bk"]
    v = x_kv @ p["wv"] + p["bv"]
    B, Sq, D = q.shape
    Sk = k.shape[1]
    dh = D // num_heads
    q = q.reshape(B, Sq, num_heads, dh).transpose(0, 2, 1, 3)
    k = k.reshape(B, Sk, num_heads, dh).transpose(0, 2, 1, 3)
    v = v.reshape(B, Sk, num_heads, dh).transpose(0, 2, 1, 3)
    s = jnp.einsum("bhqd,bhkd->bhqk", q, k) / math.sqrt(dh)
    s = jnp.where(mask[:, None, :, :] == 0, -1e9, s)
    p_attn = jax.nn.softmax(s, axis=-1)
    o = jnp.einsum("bhqk,bhkd->bhqd", p_attn, v)
    o = o.transpose(0, 2, 1, 3).reshape(B, Sq, D)
    return o @ p["wo"] + p["bo"]


def _ln_ref(z, g, b):
    m = jnp.mean(z, -1, keepdims=True)
    v = jnp.mean((z - m) ** 2, -1, keepdims=True)
    return (z - m) / jnp.sqrt(v + 1e-5) * g + b


def decoder_layer_ref(x, enc, src_mask, tgt_mask, params, num_heads):
    a = _mha_ref(x, x, tgt_mask, params["self_attn"], num_heads)
    x = _ln_ref(x + a, params["norm1_g"], params["norm1_b"])
    a = _mha_ref(x, enc, src_mask, params["cross_attn"], num_heads)
    x = _ln_ref(x + a, params["norm2_g"], params["norm2_b"])
    f = jnp.maximum(x @ params["ffn"]["w1"] + params["ffn"]["b1"], 0.0) \
        @ params["ffn"]["w2"] + params["ffn"]["b2"]
    x = _ln_ref(x + f, params["norm3_g"], params["norm3_b"])
    return x


# ----------------------------- param init -----------------------------------


def init_params(key, d_model, d_ff):
    ks = jax.random.split(key, 12)
    u = lambda k, shape, fan_in: jax.random.uniform(
        k, shape, jnp.float32, -1.0, 1.0) / math.sqrt(fan_in)

    def attn_params(k4):
        k0, k1, k2, k3 = k4
        return {
            "wq": u(k0, (d_model, d_model), d_model), "bq": jnp.zeros((1, d_model), jnp.float32),
            "wk": u(k1, (d_model, d_model), d_model), "bk": jnp.zeros((1, d_model), jnp.float32),
            "wv": u(k2, (d_model, d_model), d_model), "bv": jnp.zeros((1, d_model), jnp.float32),
            "wo": u(k3, (d_model, d_model), d_model), "bo": jnp.zeros((1, d_model), jnp.float32),
        }

    return {
        "self_attn": attn_params(ks[0:4]),
        "cross_attn": attn_params(ks[4:8]),
        "ffn": {
            "w1": u(ks[8], (d_model, d_ff), d_model), "b1": jnp.zeros((1, d_ff), jnp.float32),
            "w2": u(ks[9], (d_ff, d_model), d_ff),   "b2": jnp.zeros((1, d_model), jnp.float32),
        },
        "norm1_g": jnp.ones((1, d_model), jnp.float32), "norm1_b": jnp.zeros((1, d_model), jnp.float32),
        "norm2_g": jnp.ones((1, d_model), jnp.float32), "norm2_b": jnp.zeros((1, d_model), jnp.float32),
        "norm3_g": jnp.ones((1, d_model), jnp.float32), "norm3_b": jnp.zeros((1, d_model), jnp.float32),
    }


# ----------------------------- main ------------------------------------------


if __name__ == "__main__":
    def run_case(B, S, D, H, F, *, q_tile, label):
        key = jax.random.PRNGKey(0)
        kx, ke, kp = jax.random.split(key, 3)
        x = jax.random.normal(kx, (B, S, D), jnp.float32)
        enc = jax.random.normal(ke, (B, S, D), jnp.float32)
        tgt_mask = jnp.broadcast_to(jnp.tril(jnp.ones((S, S), jnp.float32)), (B, S, S))
        src_mask = jnp.ones((B, S, S), jnp.float32)
        params = init_params(kp, D, F)

        out = decoder_layer(x, enc, src_mask, tgt_mask, params, num_heads=H,
                            q_tile=q_tile)
        out = jax.block_until_ready(out)
        ref = decoder_layer_ref(x, enc, src_mask, tgt_mask, params, num_heads=H)

        assert out.shape == (B, S, D), (label, out.shape)
        out_f32 = out.astype(jnp.float32)
        err = float(jnp.max(jnp.abs(out_f32 - ref)))
        # bf16 MXU operands + bf16 inter-kernel activations + approx reciprocal
        # -> loosened tolerance vs the f32 reference.
        assert jnp.allclose(out_f32, ref, rtol=5e-2, atol=5e-2), (label, err)

    # Base small config.
    run_case(2, 8, 32, 4, 64, q_tile=256, label="base")
    # Exercises the query-length padding / multi-tile path (S not divisible by tile).
    run_case(2, 12, 32, 4, 64, q_tile=8, label="padded")

    print("KERNEL_OK")
</pallas_src>

<mosaic_0001>
module attributes {stable_mosaic.version = 11 : i64} {
  func.func @_copy(%arg0: i32, %arg1: memref<8x128xf32, #tpu.memory_space<vmem>>, %arg2: memref<8x128xf32, #tpu.memory_space<vmem>>) attributes {dimension_semantics = [#tpu.dimension_semantics<arbitrary>], iteration_bounds = array<i64: 1>, scalar_prefetch = 0 : i64, scratch_operands = 0 : i64, tpu.core_type = #tpu.core_type<tc>, window_params = [{pipeline_mode = #tpu.pipeline_mode<synchronous>, transform_indices = @transform_0, window_bounds = array<i64: 8, 128>}, {pipeline_mode = #tpu.pipeline_mode<synchronous>, transform_indices = @transform_1, window_bounds = array<i64: 8, 128>}]} {
    %c0 = arith.constant 0 : index
    %c0_0 = arith.constant 0 : index
    %0 = vector.load %arg1[%c0, %c0_0] : memref<8x128xf32, #tpu.memory_space<vmem>>, vector<8x128xf32>
    %c0_1 = arith.constant 0 : index
    %c0_2 = arith.constant 0 : index
    %1 = vector.load %arg2[%c0_1, %c0_2] : memref<8x128xf32, #tpu.memory_space<vmem>>, vector<8x128xf32>
    tpu.vector_store %arg2[%c0_1, %c0_2], %0 {strides = array<i32>} : memref<8x128xf32, #tpu.memory_space<vmem>>, vector<8x128xf32>,
    return
  }
  func.func @transform_0(%arg0: i32) -> (i32, i32) {
    %c0_i32 = arith.constant 0 : i32
    %c0_i32_0 = arith.constant 0 : i32
    %c0_i32_1 = arith.constant 0 : i32
    return %c0_i32, %c0_i32_0 : i32, i32
  }
  func.func @transform_1(%arg0: i32) -> (i32, i32) {
    %c0_i32 = arith.constant 0 : i32
    %c0_i32_0 = arith.constant 0 : i32
    %c0_i32_1 = arith.constant 0 : i32
    return %c0_i32, %c0_i32_0 : i32, i32
  }
}

module attributes {stable_mosaic.version = 11 : i64} {
  func.func @_kv_proj_kernel(%arg0: i32, %arg1: i32, %arg2: memref<1x8x32xbf16, #tpu.memory_space<vmem>>, %arg3: memref<32x64xbf16, #tpu.memory_space<vmem>>, %arg4: memref<1x64xf32, #tpu.memory_space<vmem>>, %arg5: memref<1x4x8x8xbf16, #tpu.memory_space<vmem>>, %arg6: memref<1x4x8x8xbf16, #tpu.memory_space<vmem>>) attributes {dimension_semantics = [#tpu.dimension_semantics<parallel>, #tpu.dimension_semantics<parallel>], iteration_bounds = array<i64: 2, 1>, scalar_prefetch = 0 : i64, scratch_operands = 0 : i64, tpu.core_type = #tpu.core_type<tc>, window_params = [{transform_indices = @transform_0, window_bounds = array<i64: 1, 8, 32>}, {pipeline_mode = #tpu.pipeline_mode<synchronous>, transform_indices = @transform_1, window_bounds = array<i64: 32, 64>}, {pipeline_mode = #tpu.pipeline_mode<synchronous>, transform_indices = @transform_2, window_bounds = array<i64: 1, 64>}, {transform_indices = @transform_3, window_bounds = array<i64: 1, 4, 8, 8>}, {transform_indices = @transform_4, window_bounds = array<i64: 1, 4, 8, 8>}]} {
    %c0 = arith.constant 0 : index
    %c0_0 = arith.constant 0 : index
    %c0_1 = arith.constant 0 : index
    %0 = vector.load %arg2[%c0, %c0_0, %c0_1] : memref<1x8x32xbf16, #tpu.memory_space<vmem>>, vector<1x8x32xbf16>
    %1 = vector.shape_cast %0 : vector<1x8x32xbf16> to vector<8x32xbf16>
    %c0_2 = arith.constant 0 : index
    %c0_3 = arith.constant 0 : index
    %2 = vector.load %arg3[%c0_2, %c0_3] : memref<32x64xbf16, #tpu.memory_space<vmem>>, vector<32x64xbf16>
    %cst = arith.constant dense<0.000000e+00> : vector<8x64xf32>
    %3 = tpu.matmul %1, %2, %cst {dimension_numbers = #tpu.dot_dimension_numbers<[1], [0], [0], [1], [0, 0, 1, 1], [], []>} : vector<8x32xbf16>, vector<32x64xbf16>, vector<8x64xf32> -> vector<8x64xf32>
    %c0_4 = arith.constant 0 : index
    %c0_5 = arith.constant 0 : index
    %4 = vector.load %arg4[%c0_4, %c0_5] : memref<1x64xf32, #tpu.memory_space<vmem>>, vector<1x64xf32>
    %5 = vector.broadcast %4 : vector<1x64xf32> to vector<8x64xf32>
    %6 = arith.addf %3, %5 : vector<8x64xf32>
    %7 = vector.extract_strided_slice %6 {offsets = [0, 0], sizes = [8, 8], strides = [1, 1]} : vector<8x64xf32> to vector<8x8xf32>
    %8 = arith.truncf %7 : vector<8x8xf32> to vector<8x8xbf16>
    %c0_6 = arith.constant 0 : index
    %c0_7 = arith.constant 0 : index
    %c0_8 = arith.constant 0 : index
    %c0_9 = arith.constant 0 : index
    %9 = vector.load %arg5[%c0_6, %c0_7, %c0_8, %c0_9] : memref<1x4x8x8xbf16, #tpu.memory_space<vmem>>, vector<1x1x8x8xbf16>
    %10 = vector.shape_cast %9 : vector<1x1x8x8xbf16> to vector<8x8xbf16>
    %11 = vector.shape_cast %8 : vector<8x8xbf16> to vector<1x1x8x8xbf16>
    tpu.vector_store %arg5[%c0_6, %c0_7, %c0_8, %c0_9], %11 {strides = array<i32>} : memref<1x4x8x8xbf16, #tpu.memory_space<vmem>>, vector<1x1x8x8xbf16>,
    %12 = vector.extract_strided_slice %6 {offsets = [0, 32], sizes = [8, 8], strides = [1, 1]} : vector<8x64xf32> to vector<8x8xf32>
    %13 = arith.truncf %12 : vector<8x8xf32> to vector<8x8xbf16>
    %c0_10 = arith.constant 0 : index
    %c0_11 = arith.constant 0 : index
    %c0_12 = arith.constant 0 : index
    %c0_13 = arith.constant 0 : index
    %14 = vector.load %arg6[%c0_10, %c0_11, %c0_12, %c0_13] : memref<1x4x8x8xbf16, #tpu.memory_space<vmem>>, vector<1x1x8x8xbf16>
    %15 = vector.shape_cast %14 : vector<1x1x8x8xbf16> to vector<8x8xbf16>
    %16 = vector.shape_cast %13 : vector<8x8xbf16> to vector<1x1x8x8xbf16>
    tpu.vector_store %arg6[%c0_10, %c0_11, %c0_12, %c0_13], %16 {strides = array<i32>} : memref<1x4x8x8xbf16, #tpu.memory_space<vmem>>, vector<1x1x8x8xbf16>,
    %17 = vector.extract_strided_slice %6 {offsets = [0, 8], sizes = [8, 8], strides = [1, 1]} : vector<8x64xf32> to vector<8x8xf32>
    %18 = arith.truncf %17 : vector<8x8xf32> to vector<8x8xbf16>
    %c0_14 = arith.constant 0 : index
    %c1 = arith.constant 1 : index
    %c0_15 = arith.constant 0 : index
    %c0_16 = arith.constant 0 : index
    %19 = vector.load %arg5[%c0_14, %c1, %c0_15, %c0_16] : memref<1x4x8x8xbf16, #tpu.memory_space<vmem>>, vector<1x1x8x8xbf16>
    %20 = vector.shape_cast %19 : vector<1x1x8x8xbf16> to vector<8x8xbf16>
    %21 = vector.shape_cast %18 : vector<8x8xbf16> to vector<1x1x8x8xbf16>
    tpu.vector_store %arg5[%c0_14, %c1, %c0_15, %c0_16], %21 {strides = array<i32>} : memref<1x4x8x8xbf16, #tpu.memory_space<vmem>>, vector<1x1x8x8xbf16>,
    %22 = vector.extract_strided_slice %6 {offsets = [0, 40], sizes = [8, 8], strides = [1, 1]} : vector<8x64xf32> to vector<8x8xf32>
    %23 = arith.truncf %22 : vector<8x8xf32> to vector<8x8xbf16>
    %c0_17 = arith.constant 0 : index
    %c1_18 = arith.constant 1 : index
    %c0_19 = arith.constant 0 : index
    %c0_20 = arith.constant 0 : index
    %24 = vector.load %arg6[%c0_17, %c1_18, %c0_19, %c0_20] : memref<1x4x8x8xbf16, #tpu.memory_space<vmem>>, vector<1x1x8x8xbf16>
    %25 = vector.shape_cast %24 : vector<1x1x8x8xbf16> to vector<8x8xbf16>
    %26 = vector.shape_cast %23 : vector<8x8xbf16> to vector<1x1x8x8xbf16>
    tpu.vector_store %arg6[%c0_17, %c1_18, %c0_19, %c0_20], %26 {strides = array<i32>} : memref<1x4x8x8xbf16, #tpu.memory_space<vmem>>, vector<1x1x8x8xbf16>,
    %27 = vector.extract_strided_slice %6 {offsets = [0, 16], sizes = [8, 8], strides = [1, 1]} : vector<8x64xf32> to vector<8x8xf32>
    %28 = arith.truncf %27 : vector<8x8xf32> to vector<8x8xbf16>
    %c0_21 = arith.constant 0 : index
    %c2 = arith.constant 2 : index
    %c0_22 = arith.constant 0 : index
    %c0_23 = arith.constant 0 : index
    %29 = vector.load %arg5[%c0_21, %c2, %c0_22, %c0_23] : memref<1x4x8x8xbf16, #tpu.memory_space<vmem>>, vector<1x1x8x8xbf16>
    %30 = vector.shape_cast %29 : vector<1x1x8x8xbf16> to vector<8x8xbf16>
    %31 = vector.shape_cast %28 : vector<8x8xbf16> to vector<1x1x8x8xbf16>
    tpu.vector_store %arg5[%c0_21, %c2, %c0_22, %c0_23], %31 {strides = array<i32>} : memref<1x4x8x8xbf16, #tpu.memory_space<vmem>>, vector<1x1x8x8xbf16>,
    %32 = vector.extract_strided_slice %6 {offsets = [0, 48], sizes = [8, 8], strides = [1, 1]} : vector<8x64xf32> to vector<8x8xf32>
    %33 = arith.truncf %32 : vector<8x8xf32> to vector<8x8xbf16>
    %c0_24 = arith.constant 0 : index
    %c2_25 = arith.constant 2 : index
    %c0_26 = arith.constant 0 : index
    %c0_27 = arith.constant 0 : index
    %34 = vector.load %arg6[%c0_24, %c2_25, %c0_26, %c0_27] : memref<1x4x8x8xbf16, #tpu.memory_space<vmem>>, vector<1x1x8x8xbf16>
    %35 = vector.shape_cast %34 : vector<1x1x8x8xbf16> to vector<8x8xbf16>
    %36 = vector.shape_cast %33 : vector<8x8xbf16> to vector<1x1x8x8xbf16>
    tpu.vector_store %arg6[%c0_24, %c2_25, %c0_26, %c0_27], %36 {strides = array<i32>} : memref<1x4x8x8xbf16, #tpu.memory_space<vmem>>, vector<1x1x8x8xbf16>,
    %37 = vector.extract_strided_slice %6 {offsets = [0, 24], sizes = [8, 8], strides = [1, 1]} : vector<8x64xf32> to vector<8x8xf32>
    %38 = arith.truncf %37 : vector<8x8xf32> to vector<8x8xbf16>
    %c0_28 = arith.constant 0 : index
    %c3 = arith.constant 3 : index
    %c0_29 = arith.constant 0 : index
    %c0_30 = arith.constant 0 : index
    %39 = vector.load %arg5[%c0_28, %c3, %c0_29, %c0_30] : memref<1x4x8x8xbf16, #tpu.memory_space<vmem>>, vector<1x1x8x8xbf16>
    %40 = vector.shape_cast %39 : vector<1x1x8x8xbf16> to vector<8x8xbf16>
    %41 = vector.shape_cast %38 : vector<8x8xbf16> to vector<1x1x8x8xbf16>
    tpu.vector_store %arg5[%c0_28, %c3, %c0_29, %c0_30], %41 {strides = array<i32>} : memref<1x4x8x8xbf16, #tpu.memory_space<vmem>>, vector<1x1x8x8xbf16>,
    %42 = vector.extract_strided_slice %6 {offsets = [0, 56], sizes = [8, 8], strides = [1, 1]} : vector<8x64xf32> to vector<8x8xf32>
    %43 = arith.truncf %42 : vector<8x8xf32> to vector<8x8xbf16>
    %c0_31 = arith.constant 0 : index
    %c3_32 = arith.constant 3 : index
    %c0_33 = arith.constant 0 : index
    %c0_34 = arith.constant 0 : index
    %44 = vector.load %arg6[%c0_31, %c3_32, %c0_33, %c0_34] : memref<1x4x8x8xbf16, #tpu.memory_space<vmem>>, vector<1x1x8x8xbf16>
    %45 = vector.shape_cast %44 : vector<1x1x8x8xbf16> to vector<8x8xbf16>
    %46 = vector.shape_cast %43 : vector<8x8xbf16> to vector<1x1x8x8xbf16>
    tpu.vector_store %arg6[%c0_31, %c3_32, %c0_33, %c0_34], %46 {strides = array<i32>} : memref<1x4x8x8xbf16, #tpu.memory_space<vmem>>, vector<1x1x8x8xbf16>,
    return
  }
  func.func @transform_0(%arg0: i32, %arg1: i32) -> (i32, i32, i32) {
    %c0_i32 = arith.constant 0 : i32
    %c0_i32_0 = arith.constant 0 : i32
    return %arg0, %arg1, %c0_i32 : i32, i32, i32
  }
  func.func @transform_1(%arg0: i32, %arg1: i32) -> (i32, i32) {
    %c0_i32 = arith.constant 0 : i32
    %c0_i32_0 = arith.constant 0 : i32
    %c0_i32_1 = arith.constant 0 : i32
    return %c0_i32, %c0_i32_0 : i32, i32
  }
  func.func @transform_2(%arg0: i32, %arg1: i32) -> (i32, i32) {
    %c0_i32 = arith.constant 0 : i32
    %c0_i32_0 = arith.constant 0 : i32
    %c0_i32_1 = arith.constant 0 : i32
    return %c0_i32, %c0_i32_0 : i32, i32
  }
  func.func @transform_3(%arg0: i32, %arg1: i32) -> (i32, i32, i32, i32) {
    %c0_i32 = arith.constant 0 : i32
    %c0_i32_0 = arith.constant 0 : i32
    %c0_i32_1 = arith.constant 0 : i32
    return %arg0, %c0_i32, %arg1, %c0_i32_0 : i32, i32, i32, i32
  }
  func.func @transform_4(%arg0: i32, %arg1: i32) -> (i32, i32, i32, i32) {
    %c0_i32 = arith.constant 0 : i32
    %c0_i32_0 = arith.constant 0 : i32
    %c0_i32_1 = arith.constant 0 : i32
    return %arg0, %c0_i32, %arg1, %c0_i32_0 : i32, i32, i32, i32
  }
}

</mosaic_0001>

<llo_original>
// kernel: tpu_custom_call.1
$region0: #{tpu_custom_call.1}
  #allocation0 [shape = 'u32[]', space=smem, size = 0x4, offset = 0x4, fixed_abs, tag = 'smem constant byte address 0x4 - core index']
  #allocation1 [shape = 'u32[144,128]{1,0:T(1,128)}', space=vmem, size = 0x12000, scoped, tag = 'internal scratch']
  %s0 = inlined_call_operand.hbm [shape: f32[8,128], index: 0, kind: input, shape index: {}]
  %s1 = inlined_call_operand.hbm [shape: f32[8,128], index: 1, kind: output, shape index: {}]
  %s2 = sld [smem:[#allocation0]]
  $region18: #{tpu_custom_call.1} parent=0
    _
  %s4 = ssub.s32 1, %s2
  %s5 = scalar_select 0, %s4, %s2
  $region1: #{tpu_custom_call.1} parent=0
    #allocation2 [shape = 'u8[4096]{0}', space=vmem, size = 0x1000, scoped, tag = 'input window, operand 0, single buffered']
    #allocation3 [shape = 's32[1]{0}', space=sflag, size = 0x4, scoped, tag = 'scoped memory for tpu_custom_call.1']
    #allocation4 [shape = 's32[1]{0}', space=sflag, size = 0x4, scoped, tag = 'scoped memory for tpu_custom_call.1']
    #allocation5 [shape = 'u8[4096]{0}', space=vmem, size = 0x1000, scoped, tag = 'output window, operand 0, single buffered']
    %6 = vsyncpa [#allocation3], 0
    %7 = vsyncpa [#allocation4], 0
    // Predicated region
    $region2: #{tpu_custom_call.1} parent=1 // pred_check
      _
    $region3: #{tpu_custom_call.1} parent=1 // pred_check_branch
      %9 = sbr.rel (0) target = $region5
    $region4: #{tpu_custom_call.1} parent=1 // pred_region
      %s11 = ssub.s32 128, 128
      %12 = vsyncadd [#allocation3], %s11
      %s14 = sshll.u32 [#allocation2], 4
      %s15 = int_to_ptr.vmem [resolvable:$true] %s14
      %17 = dma.hbm_to_vmem [thread:$0]  %s0, 128, %s15, [#allocation3]
    $region5: #{tpu_custom_call.1} parent=1 // pred_fallthru
      _
    // Predicated region
    $region6: #{tpu_custom_call.1} parent=1 // pred_check
      _
    $region7: #{tpu_custom_call.1} parent=1 // pred_check_branch
      %19 = sbr.rel (0) target = $region9
    $region8: #{tpu_custom_call.1} parent=1 // pred_region
      %20 = dma.done [#allocation3], 128
    $region9: #{tpu_custom_call.1} parent=1 // pred_fallthru
      _
    %v21 = vld [vmem:[#allocation2] sm:$0xff]
    %22 = vst [vmem:[#allocation5] sm:$0xff] %v21
    // Predicated region
    $region10: #{tpu_custom_call.1} parent=1 // pred_check
      _
    $region11: #{tpu_custom_call.1} parent=1 // pred_check_branch
      %24 = sbr.rel (0) target = $region13
    $region12: #{tpu_custom_call.1} parent=1 // pred_region
      %s26 = ssub.s32 128, 128
      %27 = vsyncadd [#allocation4], %s26
      %s29 = sshll.u32 [#allocation5], 4
      %s30 = int_to_ptr.vmem [resolvable:$true] %s29
      %32 = dma.vmem_to_hbm [thread:$0]  %s30, 128, %s1, [#allocation4]
    $region13: #{tpu_custom_call.1} parent=1 // pred_fallthru
      _
    // Predicated region
    $region14: #{tpu_custom_call.1} parent=1 // pred_check
      _
    $region15: #{tpu_custom_call.1} parent=1 // pred_check_branch
      %34 = sbr.rel (0) target = $region17
    $region16: #{tpu_custom_call.1} parent=1 // pred_region
      %35 = dma.done [#allocation4], 128
    $region17: #{tpu_custom_call.1} parent=1 // pred_fallthru
      _
    %36 = vsyncpa [#allocation3], 1
    %37 = vsyncpa [#allocation4], 1

// kernel: tpu_custom_call.1
$region0: #{tpu_custom_call.1}
  #allocation0 [shape = 'u32[]', space=smem, size = 0x4, offset = 0x4, fixed_abs, tag = 'smem constant byte address 0x4 - core index']
  #allocation1 [shape = 'u32[144,128]{1,0:T(1,128)}', space=vmem, size = 0x12000, scoped, tag = 'internal scratch']
  %s0 = inlined_call_operand.hbm [shape: bf16[2,8,32], index: 0, kind: input, shape index: {}]
  %s1 = inlined_call_operand.hbm [shape: bf16[32,64], index: 1, kind: input, shape index: {}]
  %s2 = inlined_call_operand.hbm [shape: f32[1,64], index: 2, kind: input, shape index: {}]
  %s3 = inlined_call_operand.hbm [shape: bf16[2,4,8,8], index: 3, kind: output, shape index: {0}]
  %s4 = inlined_call_operand.hbm [shape: bf16[2,4,8,8], index: 4, kind: output, shape index: {1}]
  %5 = xla_tuple %s3, %s4
  %s6 = sld [smem:[#allocation0]]
  $region65: #{tpu_custom_call.1} parent=0
    _
  %s8 = ssub.s32 1, %s6
  %s9 = scalar_select 0, %s8, %s6
  $region1: #{tpu_custom_call.1} parent=0
    #allocation2 [shape = 'u8[4096]{0}', space=vmem, size = 0x1000, scoped, tag = 'input window, operand 0']
    #allocation3 [shape = 's32[2]{0}', space=sflag, size = 0x8, scoped, tag = 'scoped memory for tpu_custom_call.1']
    #allocation4 [shape = 's32[2]{0}', space=sflag, size = 0x8, scoped, tag = 'scoped memory for tpu_custom_call.1']
    #allocation5 [shape = 'u8[8192]{0}', space=vmem, size = 0x2000, scoped, tag = 'input window, operand 1, single buffered']
    #allocation6 [shape = 's32[1]{0}', space=sflag, size = 0x4, scoped, tag = 'scoped memory for tpu_custom_call.1']
    #allocation7 [shape = 'u8[512]{0}', space=vmem, size = 0x400, scoped, tag = 'input window, operand 2, single buffered']
    #allocation8 [shape = 'u8[16384]{0}', space=vmem, size = 0x4000, scoped, tag = 'output window, operand 0']
    #allocation9 [shape = 'u8[16384]{0}', space=vmem, size = 0x4000, scoped, tag = 'output window, operand 1']
    #allocation10 [shape = 's32[2]{0}', space=sflag, size = 0x8, scoped, tag = 'scoped memory for tpu_custom_call.1']
    %10 = vsyncpa [#allocation3], 0
    %s11 = scalar_lea.sflag [#allocation3], 1
    %12 = vsyncpa %s11, 0
    %13 = vsyncpa [#allocation6], 0
    %14 = vsyncpa [#allocation4], 0
    %s15 = scalar_lea.sflag [#allocation4], 1
    %16 = vsyncpa %s15, 0
    %17 = vsyncpa [#allocation10], 0
    %s18 = scalar_lea.sflag [#allocation10], 1
    %19 = vsyncpa %s18, 0
    loop: start=0, step=1, limit=4
    $region2: #{tpu_custom_call.1} parent=1 // loop_pre_header
      _
    $region3: #{tpu_custom_call.1} parent=1 // loop_header
      %s21 = sphi 0, %s25
      %p22 = scmp.ge.s32.totalorder %s21, 4
      %s28 = sphi 0, %s40
      %s29 = sphi 0, %s36
      %s30 = sphi 0, %s28
      %s31 = sphi 0, %s29
      %s32 = sphi 0, %s30
      %s33 = sphi 0, %s31
      %s45 = sphi 0, %s47
      %s48 = sphi 0, %s45
      %s49 = sphi 0, %s48
      %s65 = sphi 0, %s49
      %s69 = sphi 0, %s69
      %s71 = sphi 0, %s69
      %s72 = sphi 0, %s71
      %s86 = sphi 0, %s72
      %s90 = sphi 0, %s90
      %s92 = sphi 0, %s90
      %s93 = sphi 0, %s92
      %s107 = sphi 0, %s93
      %s115 = sphi 0, %s117
      %s118 = sphi 0, %s115
      %s119 = sphi 0, %s118
      %s135 = sphi 0, %s119
      %s143 = sphi 0, %s145
      %s146 = sphi 0, %s143
      %s147 = sphi 0, %s146
      %s163 = sphi 0, %s147
    $region4: #{tpu_custom_call.1} parent=1 // loop_header_branch
      %24 = sbr.rel (%p22) target = $region8
    $region5: #{tpu_custom_call.1} parent=1 // loop_body
      %s26 = ssub.s32 %s21, 1
      %s27 = ssub.s32 %s21, 2
      %s34 = sadd.s32 1, %s29
      %p35 = scmp.ge.s32.totalorder %s34, 1
      %s36 = scalar_select %p35, 0, %s34
      %s37 = sadd.s32 1, %s28
      %s38 = scalar_select %p35, %s37, %s28
      %p39 = scmp.ge.s32.totalorder %s38, 2
      %s40 = scalar_select %p39, 0, %s38
      %s41 = ssub.s32 %s28, %s40
      %s42 = ssub.s32 %s29, %s36
      %s43 = sor.u32 %s41, %s42
      %p44 = scmp.eq.s32.totalorder %s43, 0
      %s46 = sadd.s32 %s45, 1
      %s47 = scalar_select %p44, %s45, %s46
      %p50 = pneg %p44
      %p51 = scmp.eq.s32.totalorder %s21, 1
      %p52 = por %p50, %p51
      %p53 = scmp.ne.s32.totalorder %s45, %s48
      %p54 = scmp.eq.s32.totalorder %s21, 0
      %p55 = por %p53, %p54
      %p56 = scmp.ne.s32.totalorder %s45, %s48
      %p57 = scmp.eq.s32.totalorder %s26, 1
      %p58 = por %p56, %p57
      %p59 = scmp.ne.s32.totalorder %s48, %s49
      %p60 = scmp.eq.s32.totalorder %s26, 0
      %p61 = por %p59, %p60
      %p62 = scmp.ne.s32.totalorder %s48, %s49
      %p63 = scmp.eq.s32.totalorder %s27, 1
      %p64 = por %p62, %p63
      %p66 = scmp.ne.s32.totalorder %s49, %s65
      %p67 = scmp.eq.s32.totalorder %s27, 0
      %p68 = por %p66, %p67
      %s70 = sadd.s32 %s69, 1
      %p73 = scmp.eq.s32.totalorder %s21, 1
      %p74 = scmp.ne.s32.totalorder %s69, %s71
      %p75 = scmp.eq.s32.totalorder %s21, 0
      %p76 = por %p74, %p75
      %p77 = scmp.ne.s32.totalorder %s69, %s71
      %p78 = scmp.eq.s32.totalorder %s26, 1
      %p79 = por %p77, %p78
      %p80 = scmp.ne.s32.totalorder %s71, %s72
      %p81 = scmp.eq.s32.totalorder %s26, 0
      %p82 = por %p80, %p81
      %p83 = scmp.ne.s32.totalorder %s71, %s72
      %p84 = scmp.eq.s32.totalorder %s27, 1
      %p85 = por %p83, %p84
      %p87 = scmp.ne.s32.totalorder %s72, %s86
      %p88 = scmp.eq.s32.totalorder %s27, 0
      %p89 = por %p87, %p88
      %s91 = sadd.s32 %s90, 1
      %p94 = scmp.eq.s32.totalorder %s21, 1
      %p95 = scmp.ne.s32.totalorder %s90, %s92
      %p96 = scmp.eq.s32.totalorder %s21, 0
      %p97 = por %p95, %p96
      %p98 = scmp.ne.s32.totalorder %s90, %s92
      %p99 = scmp.eq.s32.totalorder %s26, 1
      %p100 = por %p98, %p99
      %p101 = scmp.ne.s32.totalorder %s92, %s93
      %p102 = scmp.eq.s32.totalorder %s26, 0
      %p103 = por %p101, %p102
      %p104 = scmp.ne.s32.totalorder %s92, %s93
      %p105 = scmp.eq.s32.totalorder %s27, 1
      %p106 = por %p104, %p105
      %p108 = scmp.ne.s32.totalorder %s93, %s107
      %p109 = scmp.eq.s32.totalorder %s27, 0
      %p110 = por %p108, %p109
      %s111 = ssub.s32 %s28, %s40
      %s112 = ssub.s32 %s29, %s36
      %s113 = sor.u32 %s111, %s112
      %p114 = scmp.eq.s32.totalorder %s113, 0
      %s116 = sadd.s32 %s115, 1
      %s117 = scalar_select %p114, %s115, %s116
      %p120 = pneg %p114
      %p121 = scmp.eq.s32.totalorder %s21, 1
      %p122 = por %p120, %p121
      %p123 = scmp.ne.s32.totalorder %s115, %s118
      %p124 = scmp.eq.s32.totalorder %s21, 0
      %p125 = por %p123, %p124
      %p126 = scmp.ne.s32.totalorder %s115, %s118
      %p127 = scmp.eq.s32.totalorder %s26, 1
      %p128 = por %p126, %p127
      %p129 = scmp.ne.s32.totalorder %s118, %s119
      %p130 = scmp.eq.s32.totalorder %s26, 0
      %p131 = por %p129, %p130
      %p132 = scmp.ne.s32.totalorder %s118, %s119
      %p133 = scmp.eq.s32.totalorder %s27, 1
      %p134 = por %p132, %p133
      %p136 = scmp.ne.s32.totalorder %s119, %s135
      %p137 = scmp.eq.s32.totalorder %s27, 0
      %p138 = por %p136, %p137
      %s139 = ssub.s32 %s28, %s40
      %s140 = ssub.s32 %s29, %s36
      %s141 = sor.u32 %s139, %s140
      %p142 = scmp.eq.s32.totalorder %s141, 0
      %s144 = sadd.s32 %s143, 1
      %s145 = scalar_select %p142, %s143, %s144
      %p148 = pneg %p142
      %p149 = scmp.eq.s32.totalorder %s21, 1
      %p150 = por %p148, %p149
      %p151 = scmp.ne.s32.totalorder %s143, %s146
      %p152 = scmp.eq.s32.totalorder %s21, 0
      %p153 = por %p151, %p152
      %p154 = scmp.ne.s32.totalorder %s143, %s146
      %p155 = scmp.eq.s32.totalorder %s26, 1
      %p156 = por %p154, %p155
      %p157 = scmp.ne.s32.totalorder %s146, %s147
      %p158 = scmp.eq.s32.totalorder %s26, 0
      %p159 = por %p157, %p158
      %p160 = scmp.ne.s32.totalorder %s146, %s147
      %p161 = scmp.eq.s32.totalorder %s27, 1
      %p162 = por %p160, %p161
      %p164 = scmp.ne.s32.totalorder %s147, %s163
      %p165 = scmp.eq.s32.totalorder %s27, 0
      %p166 = por %p164, %p165
      %p167 = scmp.le.s32.totalorder 1, %s21
      %p168 = scmp.lt.s32.totalorder %s21, 3
      %p169 = pnand %p167, %p168
      %p170 = pneg %p169
      // Predicated region
      $region9: #{tpu_custom_call.1} parent=5 // pred_check
        _
      $region10: #{tpu_custom_call.1} parent=5 // pred_check_branch
        %172 = sbr.rel (%p169) target = $region12
      $region11: #{tpu_custom_call.1} parent=5 // pred_region
        %s173 = ssub.s32 %s21, 1
        // Predicated region
        $region13: #{tpu_custom_call.1} parent=11 // pred_check
          %p174 = pneg %p82
        $region14: #{tpu_custom_call.1} parent=11 // pred_check_branch
          %176 = sbr.rel (%p174) target = $region16
        $region15: #{tpu_custom_call.1} parent=11 // pred_region
          %s178 = ssub.s32 256, 256
          %179 = vsyncadd [#allocation6], %s178
          %s180 = sshll.u32 [#allocation5], 4
          %s181 = int_to_ptr.vmem [resolvable:$true] %s180
          %186 = dma.hbm_to_vmem [thread:$0]  %s1, 256, %s181, [#allocation6], 64, 64, 4
        $region16: #{tpu_custom_call.1} parent=11 // pred_fallthru
          _
        // Predicated region
        $region17: #{tpu_custom_call.1} parent=11 // pred_check
          %p187 = pneg %p103
        $region18: #{tpu_custom_call.1} parent=11 // pred_check_branch
          %189 = sbr.rel (%p187) target = $region20
        $region19: #{tpu_custom_call.1} parent=11 // pred_region
          %s191 = ssub.s32 16, 16
          %192 = vsyncadd [#allocation6], %s191
          %s194 = sshll.u32 [#allocation7], 4
          %s195 = int_to_ptr.vmem [resolvable:$true] %s194
          %197 = dma.hbm_to_vmem [thread:$0]  %s2, 16, %s195, [#allocation6]
        $region20: #{tpu_custom_call.1} parent=11 // pred_fallthru
          _
      $region12: #{tpu_custom_call.1} parent=5 // pred_fallthru
        _
      %p198 = scmp.lt.s32.totalorder %s21, 2
      // Predicated region
      $region21: #{tpu_custom_call.1} parent=5 // pred_check
        %p199 = pneg %p198
      $region22: #{tpu_custom_call.1} parent=5 // pred_check_branch
        %201 = sbr.rel (%p199) target = $region24
      $region23: #{tpu_custom_call.1} parent=5 // pred_region
        // Predicated region
        $region25: #{tpu_custom_call.1} parent=23 // pred_check
          %p202 = pneg %p55
        $region26: #{tpu_custom_call.1} parent=23 // pred_check_branch
          %204 = sbr.rel (%p202) target = $region28
        $region27: #{tpu_custom_call.1} parent=23 // pred_region
          %s205 = sand.u32 %s45, 1
          %s206 = scalar_lea.sflag [#allocation3], %s205
          %s207 = sand.u32 %s45, 1
          %s208 = smul.addr %s207, 4
          %s209 = scalar_lea.vmem [#allocation2], %s208
          %s211 = ssub.s32 64, 64
          %212 = vsyncadd %s206, %s211
          %s213 = sadd.s32 %s29, %s28
          %s214 = smul.addr %s213, 64
          %s215 = scalar_lea.hbm %s0, %s214
          %s217 = sshll.u32 %s209, 4
          %s218 = int_to_ptr.vmem [resolvable:$true] %s217
          %220 = dma.hbm_to_vmem [thread:$0]  %s215, 64, %s218, %s206
        $region28: #{tpu_custom_call.1} parent=23 // pred_fallthru
          _
      $region24: #{tpu_custom_call.1} parent=5 // pred_fallthru
        _
      %p221 = scmp.le.s32.totalorder 1, %s21
      %p222 = scmp.lt.s32.totalorder %s21, 3
      %p223 = pnand %p221, %p222
      %p224 = pneg %p223
      // Predicated region
      $region29: #{tpu_custom_call.1} parent=5 // pred_check
        _
      $region30: #{tpu_custom_call.1} parent=5 // pred_check_branch
        %226 = sbr.rel (%p223) target = $region32
      $region31: #{tpu_custom_call.1} parent=5 // pred_region
        %s227 = ssub.s32 %s21, 1
        %s228 = sand.u32 %s48, 1
        %s229 = scalar_lea.sflag [#allocation3], %s228
        %s230 = sand.u32 %s48, 1
        %s231 = smul.addr %s230, 4
        %s232 = scalar_lea.vmem [#allocation2], %s231
        // Predicated region
        $region33: #{tpu_custom_call.1} parent=31 // pred_check
          %p233 = pneg %p61
        $region34: #{tpu_custom_call.1} parent=31 // pred_check_branch
          %235 = sbr.rel (%p233) target = $region36
        $region35: #{tpu_custom_call.1} parent=31 // pred_region
          %236 = dma.done %s229, 64
        $region36: #{tpu_custom_call.1} parent=31 // pred_fallthru
          _
        // Predicated region
        $region37: #{tpu_custom_call.1} parent=31 // pred_check
          %p237 = pneg %p82
        $region38: #{tpu_custom_call.1} parent=31 // pred_check_branch
          %239 = sbr.rel (%p237) target = $region40
        $region39: #{tpu_custom_call.1} parent=31 // pred_region
          %240 = dma.done [#allocation6], 256
        $region40: #{tpu_custom_call.1} parent=31 // pred_fallthru
          _
        // Predicated region
        $region41: #{tpu_custom_call.1} parent=31 // pred_check
          %p241 = pneg %p103
        $region42: #{tpu_custom_call.1} parent=31 // pred_check_branch
          %243 = sbr.rel (%p241) target = $region44
        $region43: #{tpu_custom_call.1} parent=31 // pred_region
          %244 = dma.done [#allocation6], 16
        $region44: #{tpu_custom_call.1} parent=31 // pred_fallthru
          _
        %s245 = sand.u32 %s48, 1
        %s246 = scalar_lea.sflag [#allocation3], %s245
        %s247 = sand.u32 %s48, 1
        %s248 = smul.addr %s247, 4
        %s249 = scalar_lea.vmem [#allocation2], %s248
        %p250 = pneg %p61
        %p251 = pneg %p58
        %p252 = pneg %p82
        %p253 = pneg %p79
        %p254 = pneg %p103
        %p255 = pneg %p100
        %p256 = pneg %p131
        %p257 = pneg %p128
        %s258 = sand.u32 %s118, 1
        %s259 = scalar_lea.sflag [#allocation4], %s258
        %s260 = sand.u32 %s118, 1
        %s261 = smul.addr %s260, 16
        %s262 = scalar_lea.vmem [#allocation8], %s261
        %p263 = pneg %p159
        %p264 = pneg %p156
        %s265 = sand.u32 %s146, 1
        %s266 = scalar_lea.sflag [#allocation10], %s265
        %s267 = sand.u32 %s146, 1
        %s268 = smul.addr %s267, 16
        %s269 = scalar_lea.vmem [#allocation9], %s268
        %v271 = vld [vmem:[%s232] sm:$0xf]
        %v272 = vld [vmem:[#allocation5] sm:$0xf]
        %v273 = vld [vmem:[#allocation5 + $0x4] sm:$0xf]
        %v274 = vld [vmem:[#allocation5 + $0x8] sm:$0xf]
        %v275 = vld [vmem:[#allocation5 + $0xc] sm:$0xf]
        %v276 = vld [vmem:[#allocation7] sm:$0x1]
        %v278 = vlaneseq
        %v279 = vshrl.u32 %v278, 7
        %v280 = vsub.s32 0, %v279
        %v281 = vrot.slane %v276, %v280
        %v287 = vunpack.c.l.b16 %v272
        %v288 = vunpack.c.l.b16 %v273
        %v289 = vunpack.c.l.b16 %v274
        %v290 = vunpack.c.l.b16 %v275
        %v291 = vpack.c.b16 %v288, %v287
        %v292 = vpack.c.b16 %v290, %v289
        %vm295 = vcmask 261120
        %v297 = vsel %vm295, %v271, 0
        %299 = vmatprep.subr.bf16.mxu0 0
        %300 = vmatpush1.bf16.msra.mxu0 %v291
        %301 = vmatprep.subr.bf16.mxu0 0
        %302 = vmatpush1.bf16.msra.mxu0 %v292
        %303 = vmatprep.subr.bf16.mxu0 0
        %304 = vmatpush1.bf16.msra.mxu0 0
        %305 = vmatprep.subr.bf16.mxu0 0
        %306 = vmatpush1.bf16.msra.mxu0 0
        %307 = vmatprep.subr.bf16.mxu0 0
        %308 = vmatpush1.bf16.msra.mxu0 0
        %309 = vmatprep.subr.bf16.mxu0 0
        %310 = vmatpush1.bf16.msra.mxu0 0
        %311 = vmatprep.subr.bf16.mxu0 0
        %312 = vmatpush1.bf16.msra.mxu0 0
        %313 = vmatprep.subr.bf16.mxu0 0
        %314 = vmatpush1.bf16.msra.mxu0 0
        %315 = vmatprep.subr.bf16.mxu0 0
        %316 = vmatpush1.bf16.msra.mxu0 0
        %317 = vmatprep.subr.bf16.mxu0 0
        %318 = vmatpush1.bf16.msra.mxu0 0
        %319 = vmatprep.subr.bf16.mxu0 0
        %320 = vmatpush1.bf16.msra.mxu0 0
        %321 = vmatprep.subr.bf16.mxu0 0
        %322 = vmatpush1.bf16.msra.mxu0 0
        %323 = vmatprep.subr.bf16.mxu0 0
        %324 = vmatpush1.bf16.msra.mxu0 0
        %325 = vmatprep.subr.bf16.mxu0 0
        %326 = vmatpush1.bf16.msra.mxu0 0
        %327 = vmatprep.subr.bf16.mxu0 0
        %328 = vmatpush1.bf16.msra.mxu0 0
        %329 = vmatprep.subr.bf16.mxu0 0
        %330 = vmatpush1.bf16.msra.mxu0 0
        %331 = vmatprep.mubr.bf16.mxu0 0
        %332 = vmatmul.mubr.bf16.gmra.mrb[0].mxu0 %v297
        %v333 = vpop.f32.mrb[0].mxu0
        %v334 = vadd.f32 %v281, %v333
        %v335 = vpop.f32.mrb[0].mxu0
        %v336 = vpop.f32.mrb[0].mxu0
        %v337 = vpop.f32.mrb[0].mxu0
        %338 = vdwg.mxu0
        %v339 = vpack.c.bf16 %v334, %v334
        %vm340 = vcmask 60416
        %341 = vst.msk [vmem:[%s262] sm:$0xf] %vm340, %v339
        %v343 = vunpack.c.l.b16 %v339
        %v344 = vpack.c.b16 %v343, %v343
        %345 = vrot.lane.b32.xlu0 %v344, 96
        %v346 = vpop.permute.xlu0 %345
        %348 = vst.msk [vmem:[%s269] sm:$0xf] %vm340, %v346
        %349 = vrot.lane.b32.xlu0 %v344, 120
        %v350 = vpop.permute.xlu0 %349
        %s352 = scalar_lea.vmem %s262, 4 [#allocation8]
        %353 = vst.msk [vmem:[%s352] sm:$0xf] %vm340, %v350
        %354 = vrot.lane.b32.xlu0 %v344, 88
        %v355 = vpop.permute.xlu0 %354
        %s357 = scalar_lea.vmem %s269, 4 [#allocation9]
        %358 = vst.msk [vmem:[%s357] sm:$0xf] %vm340, %v355
        %359 = vrot.lane.b32.xlu0 %v344, 112
        %v360 = vpop.permute.xlu0 %359
        %s362 = scalar_lea.vmem %s262, 8 [#allocation8]
        %363 = vst.msk [vmem:[%s362] sm:$0xf] %vm340, %v360
        %364 = vrot.lane.b32.xlu0 %v344, 80
        %v365 = vpop.permute.xlu0 %364
        %s367 = scalar_lea.vmem %s269, 8 [#allocation9]
        %368 = vst.msk [vmem:[%s367] sm:$0xf] %vm340, %v365
        %369 = vrot.lane.b32.xlu0 %v344, 104
        %v370 = vpop.permute.xlu0 %369
        %s372 = scalar_lea.vmem %s262, 12 [#allocation8]
        %373 = vst.msk [vmem:[%s372] sm:$0xf] %vm340, %v370
        %374 = vrot.lane.b32.xlu0 %v344, 72
        %v375 = vpop.permute.xlu0 %374
        %s377 = scalar_lea.vmem %s269, 12 [#allocation9]
        %378 = vst.msk [vmem:[%s377] sm:$0xf] %vm340, %v375
        %s379 = sand.u32 %s118, 1
        %s380 = scalar_lea.sflag [#allocation4], %s379
        %s381 = sand.u32 %s118, 1
        %s382 = smul.addr %s381, 16
        %s383 = scalar_lea.vmem [#allocation8], %s382
        %s384 = sand.u32 %s146, 1
        %s385 = scalar_lea.sflag [#allocation10], %s384
        %s386 = sand.u32 %s146, 1
        %s387 = smul.addr %s386, 16
        %s388 = scalar_lea.vmem [#allocation9], %s387
        // Predicated region
        $region45: #{tpu_custom_call.1} parent=31 // pred_check
          %p389 = pneg %p128
        $region46: #{tpu_custom_call.1} parent=31 // pred_check_branch
          %391 = sbr.rel (%p389) target = $region48
        $region47: #{tpu_custom_call.1} parent=31 // pred_region
          %s393 = ssub.s32 256, 256
          %394 = vsyncadd %s380, %s393
          %s395 = smul.addr %s30, 4
          %s396 = sadd.s32 %s31, %s395
          %s397 = smul.addr %s396, 64
          %s398 = scalar_lea.hbm %s3, %s397
          %s399 = sshll.u32 %s383, 4
          %s400 = int_to_ptr.vmem [resolvable:$true] %s399
          %405 = dma.vmem_to_hbm [thread:$0]  %s400, 256, %s398, %s380, 64, 64, 4
        $region48: #{tpu_custom_call.1} parent=31 // pred_fallthru
          _
        // Predicated region
        $region49: #{tpu_custom_call.1} parent=31 // pred_check
          %p406 = pneg %p156
        $region50: #{tpu_custom_call.1} parent=31 // pred_check_branch
          %408 = sbr.rel (%p406) target = $region52
        $region51: #{tpu_custom_call.1} parent=31 // pred_region
          %s410 = ssub.s32 256, 256
          %411 = vsyncadd %s385, %s410
          %s412 = smul.addr %s30, 4
          %s413 = sadd.s32 %s31, %s412
          %s414 = smul.addr %s413, 64
          %s415 = scalar_lea.hbm %s4, %s414
          %s416 = sshll.u32 %s388, 4
          %s417 = int_to_ptr.vmem [resolvable:$true] %s416
          %422 = dma.vmem_to_hbm [thread:$0]  %s417, 256, %s415, %s385, 64, 64, 4
        $region52: #{tpu_custom_call.1} parent=31 // pred_fallthru
          _
      $region32: #{tpu_custom_call.1} parent=5 // pred_fallthru
        _
      %p423 = scmp.le.s32.totalorder 2, %s21
      // Predicated region
      $region53: #{tpu_custom_call.1} parent=5 // pred_check
        %p424 = pneg %p423
      $region54: #{tpu_custom_call.1} parent=5 // pred_check_branch
        %426 = sbr.rel (%p424) target = $region56
      $region55: #{tpu_custom_call.1} parent=5 // pred_region
        %s427 = ssub.s32 %s21, 2
        // Predicated region
        $region57: #{tpu_custom_call.1} parent=55 // pred_check
          %p428 = pneg %p134
        $region58: #{tpu_custom_call.1} parent=55 // pred_check_branch
          %430 = sbr.rel (%p428) target = $region60
        $region59: #{tpu_custom_call.1} parent=55 // pred_region
          %s431 = sand.u32 %s119, 1
          %s432 = scalar_lea.sflag [#allocation4], %s431
          %s433 = sand.u32 %s119, 1
          %s434 = smul.addr %s433, 16
          %s435 = scalar_lea.vmem [#allocation8], %s434
          %436 = dma.done %s432, 256
        $region60: #{tpu_custom_call.1} parent=55 // pred_fallthru
          _
        // Predicated region
        $region61: #{tpu_custom_call.1} parent=55 // pred_check
          %p437 = pneg %p162
        $region62: #{tpu_custom_call.1} parent=55 // pred_check_branch
          %439 = sbr.rel (%p437) target = $region64
        $region63: #{tpu_custom_call.1} parent=55 // pred_region
          %s440 = sand.u32 %s147, 1
          %s441 = scalar_lea.sflag [#allocation10], %s440
          %s442 = sand.u32 %s147, 1
          %s443 = smul.addr %s442, 16
          %s444 = scalar_lea.vmem [#allocation9], %s443
          %445 = dma.done %s441, 256
        $region64: #{tpu_custom_call.1} parent=55 // pred_fallthru
          _
      $region56: #{tpu_custom_call.1} parent=5 // pred_fallthru
        _
    $region6: #{tpu_custom_call.1} parent=1 // loop_footer
      %s25 = sadd.s32 1, %s21
    $region7: #{tpu_custom_call.1} parent=1 // loop_footer_branch
      %20 = sbr.rel target = $region3
    $region8: #{tpu_custom_call.1} parent=1 // loop_exit
      _
    %446 = vsyncpa [#allocation3], 1
    %s447 = scalar_lea.sflag [#allocation3], 1
    %448 = vsyncpa %s447, 1
    %449 = vsyncpa [#allocation6], 1
    %450 = vsyncpa [#allocation4], 1
    %s451 = scalar_lea.sflag [#allocation4], 1
    %452 = vsyncpa %s451, 1
    %453 = vsyncpa [#allocation10], 1
    %s454 = scalar_lea.sflag [#allocation10], 1
    %455 = vsyncpa %s454, 1

</llo_original>
